<compile_context>
chip_gen: v7x
topology: tpu7x:2x2x1
jax: 0.10.0
libtpu: 0.0.40
codegen_flags: <defaults>
</compile_context>

<pallas_src>
import functools

import jax
import jax.numpy as jnp
from jax import lax
from jax.experimental import pallas as pl
from jax.experimental.pallas import tpu as pltpu


def _round_up(a, b):
    return (a + b - 1) // b * b


def _round_down_tile(v):
    """Round a row-tile candidate down to an MXU/layout friendly multiple."""
    if v >= 256:
        return (v // 256) * 256
    for m in (128, 64, 32, 16, 8):
        if v >= m:
            return (v // m) * m
    return 8


# ----------------------------------------------------------------------------
# Kernels
# ----------------------------------------------------------------------------
def _ff_kernel_resident(x_ref, g_ref, b_ref, w1_ref, b1_ref, w2_ref, b2_ref,
                        o_ref, *, eps):
    """Single hidden block: whole FFN for one row tile, no scratch needed."""
    x = x_ref[...].astype(jnp.float32)
    mean = jnp.mean(x, axis=-1, keepdims=True)
    var = jnp.mean(jnp.square(x - mean), axis=-1, keepdims=True)
    xn = (x - mean) * lax.rsqrt(var + eps)
    xn = xn * g_ref[...].astype(jnp.float32) + b_ref[...].astype(jnp.float32)

    # Linear(dim -> hidden); weights stay in stored dtype, accumulate in f32.
    h = jnp.dot(xn.astype(w1_ref.dtype), w1_ref[...],
                preferred_element_type=jnp.float32)
    h = h + b1_ref[...].astype(jnp.float32)
    # Exact (erf) GELU in f32 (matches nn.GELU()).
    h = 0.5 * h * (1.0 + lax.erf(h * jnp.float32(0.7071067811865476)))

    # Linear(hidden -> dim) + output bias, straight to the output tile.
    out = jnp.dot(h.astype(w2_ref.dtype), w2_ref[...],
                  preferred_element_type=jnp.float32)
    o_ref[...] = (out + b2_ref[...].astype(jnp.float32)).astype(o_ref.dtype)


def _ff_kernel_tiled(x_ref, g_ref, b_ref, w1_ref, b1_ref, w2_ref, b2_ref,
                     o_ref, xn_ref, acc_ref, *, eps):
    """Grid = (row_blocks, hidden_blocks); hidden is the reduction axis."""
    j = pl.program_id(1)

    # First hidden step of this row block: zero accumulator, compute LayerNorm
    # once (reused by every hidden tile of this row block).
    @pl.when(j == 0)
    def _():
        acc_ref[...] = jnp.zeros_like(acc_ref)
        x = x_ref[...].astype(jnp.float32)
        mean = jnp.mean(x, axis=-1, keepdims=True)
        var = jnp.mean(jnp.square(x - mean), axis=-1, keepdims=True)
        xn = (x - mean) * lax.rsqrt(var + eps)
        xn = xn * g_ref[...].astype(jnp.float32) + b_ref[...].astype(jnp.float32)
        xn_ref[...] = xn.astype(xn_ref.dtype)

    h = jnp.dot(xn_ref[...], w1_ref[...], preferred_element_type=jnp.float32)
    h = h + b1_ref[...].astype(jnp.float32)
    h = 0.5 * h * (1.0 + lax.erf(h * jnp.float32(0.7071067811865476)))

    acc_ref[...] += jnp.dot(h.astype(w2_ref.dtype), w2_ref[...],
                            preferred_element_type=jnp.float32)

    @pl.when(j == pl.num_programs(1) - 1)
    def _():
        o_ref[...] = (acc_ref[...] + b2_ref[...].astype(jnp.float32)
                      ).astype(o_ref.dtype)


# ----------------------------------------------------------------------------
# Wrapper
# ----------------------------------------------------------------------------
def feed_forward(x, params, *, eps=1e-5, row_tile=None, hidden_tile=None,
                 compute_dtype=None):
    """x: (B, N, dim). params: gamma, beta, w1 (dim,hidden), b1, w2 (hidden,dim), b2.

    compute_dtype: dtype the MXU sees for both matmuls (default: w1.dtype).
    Pass jnp.bfloat16 when weights arrive as f32 to use the native bf16 MXU
    path on v6e/v7x (halves weight HBM traffic, mixed-precision numerics).
    """
    B, N, dim = x.shape
    w1, w2 = params["w1"], params["w2"]
    hidden = w1.shape[1]
    assert w1.shape == (dim, hidden) and w2.shape == (hidden, dim)

    if compute_dtype is None:
        compute_dtype = w1.dtype
    compute_dtype = jnp.dtype(compute_dtype)
    if w1.dtype != compute_dtype:
        w1 = w1.astype(compute_dtype)
    if w2.dtype != compute_dtype:
        w2 = w2.astype(compute_dtype)

    M = B * N
    x2d = x.reshape(M, dim)

    # ---- generation-aware VMEM budget --------------------------------------
    try:
        vmem_cap = int(pltpu.get_tpu_info().vmem_capacity_bytes)
    except Exception:
        vmem_cap = 64 << 20  # conservative: v7x has 64 MiB per TensorCore
    # Leave headroom for compiler-internal scratch; never request >~80% of
    # physical VMEM (v7x: ~51 MiB, v5e/v6e: ~102 MiB).
    vmem_budget = max(min(int(vmem_cap * 0.8), vmem_cap - (12 << 20)), 16 << 20)

    x_size = jnp.dtype(x.dtype).itemsize
    out_size = x_size
    w_size = compute_dtype.itemsize
    c_size = w_size

    # ---- row cap: >=2 row blocks when M allows (feeds both v7x TCs) --------
    if M >= 16:
        row_cap = min(1024, _round_up((M + 1) // 2, 8))
    else:
        row_cap = _round_up(max(M, 1), 8)

    def per_row_bytes(ht):
        multi = ht < hidden
        b = 2 * dim * x_size + 2 * dim * out_size      # x / out (double-buffered)
        b += ht * (4 + c_size)                         # h in f32 + downcast copy
        b += dim * (4 + c_size)                        # LayerNorm intermediates
        if multi:
            b += dim * 4 + dim * c_size                # f32 acc + xn scratch
        return b

    def weight_bytes(ht):
        b = 2 * (dim * ht + ht * dim + ht) * w_size    # w1, w2, b1 (double-buffered)
        b += 2 * 3 * dim * 4                           # gamma, beta, b2 tiles
        return b

    def max_row_tile(ht):
        avail = vmem_budget - weight_bytes(ht) - (2 << 20)
        return 0 if avail <= 0 else avail // per_row_bytes(ht)

    # ---- hidden tiling: prefer full residency, shrink hidden_tile first ----
    if hidden_tile is None:
        cands = [hidden] + [c for c in (2048, 1024, 512, 256, 128)
                            if c < hidden and hidden % c == 0]
        hidden_tile = cands[-1]
        for ht in cands:
            if max_row_tile(ht) >= min(row_cap, 128):
                hidden_tile = ht
                break
    assert hidden % hidden_tile == 0, "hidden must be divisible by hidden_tile"
    assert hidden_tile == hidden or hidden_tile % 128 == 0, \
        "hidden_tile < hidden must be a multiple of 128 (lane constraint)"

    # ---- row tiling: as large as the remaining VMEM budget allows ----------
    if row_tile is None:
        row_tile = int(min(row_cap, max(max_row_tile(hidden_tile), 8)))
        row_tile = _round_down_tile(row_tile)
    row_tile = max(8, _round_up(int(row_tile), 8))

    M_pad = _round_up(M, row_tile)
    if M_pad != M:
        x2d = jnp.pad(x2d, ((0, M_pad - M), (0, 0)))  # padded rows sliced off below

    n_row = M_pad // row_tile
    n_hid = hidden // hidden_tile

    gamma = params["gamma"].reshape(1, dim)
    beta = params["beta"].reshape(1, dim)
    b1 = params["b1"].reshape(1, hidden)
    b2 = params["b2"].reshape(1, dim)

    vmem_limit = weight_bytes(hidden_tile) + row_tile * per_row_bytes(hidden_tile)
    vmem_limit = int(min(max(vmem_limit + (4 << 20), 16 << 20), vmem_budget))

    if n_hid == 1:
        # Weight-resident path: constant weight block index -> w1/w2 DMA'd once;
        # no accumulator / xn scratch.
        out2d = pl.pallas_call(
            functools.partial(_ff_kernel_resident, eps=eps),
            out_shape=jax.ShapeDtypeStruct((M_pad, dim), x.dtype),
            grid_spec=pltpu.PrefetchScalarGridSpec(
                num_scalar_prefetch=0,
                grid=(n_row,),
                in_specs=[
                    pl.BlockSpec((row_tile, dim), lambda i: (i, 0)),   # x rows
                    pl.BlockSpec((1, dim), lambda i: (0, 0)),          # gamma
                    pl.BlockSpec((1, dim), lambda i: (0, 0)),          # beta
                    pl.BlockSpec((dim, hidden), lambda i: (0, 0)),     # w1
                    pl.BlockSpec((1, hidden), lambda i: (0, 0)),       # b1
                    pl.BlockSpec((hidden, dim), lambda i: (0, 0)),     # w2
                    pl.BlockSpec((1, dim), lambda i: (0, 0)),          # b2
                ],
                out_specs=pl.BlockSpec((row_tile, dim), lambda i: (i, 0)),
            ),
            compiler_params=pltpu.CompilerParams(
                dimension_semantics=("parallel",),
                vmem_limit_bytes=vmem_limit),
        )(x2d, gamma, beta, w1, b1, w2, b2)
    else:
        # Tiled-hidden fallback: hidden is the last (reduction) grid axis.
        out2d = pl.pallas_call(
            functools.partial(_ff_kernel_tiled, eps=eps),
            out_shape=jax.ShapeDtypeStruct((M_pad, dim), x.dtype),
            grid_spec=pltpu.PrefetchScalarGridSpec(
                num_scalar_prefetch=0,
                grid=(n_row, n_hid),
                in_specs=[
                    pl.BlockSpec((row_tile, dim), lambda i, j: (i, 0)),     # x
                    pl.BlockSpec((1, dim), lambda i, j: (0, 0)),            # gamma
                    pl.BlockSpec((1, dim), lambda i, j: (0, 0)),            # beta
                    pl.BlockSpec((dim, hidden_tile), lambda i, j: (0, j)),  # w1 tile
                    pl.BlockSpec((1, hidden_tile), lambda i, j: (0, j)),    # b1 tile
                    pl.BlockSpec((hidden_tile, dim), lambda i, j: (j, 0)),  # w2 tile
                    pl.BlockSpec((1, dim), lambda i, j: (0, 0)),            # b2
                ],
                out_specs=pl.BlockSpec((row_tile, dim), lambda i, j: (i, 0)),
                scratch_shapes=[
                    pltpu.VMEM((row_tile, dim), compute_dtype),  # LayerNorm'd rows
                    pltpu.VMEM((row_tile, dim), jnp.float32),    # f32 accumulator
                ],
            ),
            compiler_params=pltpu.CompilerParams(
                dimension_semantics=("parallel", "arbitrary"),
                vmem_limit_bytes=vmem_limit),
        )(x2d, gamma, beta, w1, b1, w2, b2)

    return out2d[:M].reshape(B, N, dim)


# ----------------------------------------------------------------------------
# Params / reference / smoke test
# ----------------------------------------------------------------------------
def init_params(key, dim, hidden_dim, dtype=jnp.float32):
    k1, k2, k3, k4 = jax.random.split(key, 4)
    gamma = jnp.ones((dim,), dtype)
    beta = jnp.zeros((dim,), dtype)
    w1 = (jax.random.normal(k1, (dim, hidden_dim), jnp.float32) / jnp.sqrt(dim)).astype(dtype)
    b1 = (jax.random.normal(k2, (hidden_dim,), jnp.float32) * 0.01).astype(dtype)
    w2 = (jax.random.normal(k3, (hidden_dim, dim), jnp.float32) / jnp.sqrt(hidden_dim)).astype(dtype)
    b2 = (jax.random.normal(k4, (dim,), jnp.float32) * 0.01).astype(dtype)
    return dict(gamma=gamma, beta=beta, w1=w1, b1=b1, w2=w2, b2=b2)


def _reference(x, p, eps=1e-5):
    xf = x.astype(jnp.float32)
    mean = jnp.mean(xf, axis=-1, keepdims=True)
    var = jnp.mean(jnp.square(xf - mean), axis=-1, keepdims=True)
    xn = (xf - mean) / jnp.sqrt(var + eps) * p["gamma"].astype(jnp.float32) \
         + p["beta"].astype(jnp.float32)
    h = xn @ p["w1"].astype(jnp.float32) + p["b1"].astype(jnp.float32)
    h = 0.5 * h * (1.0 + lax.erf(h / jnp.sqrt(2.0)))
    return h @ p["w2"].astype(jnp.float32) + p["b2"].astype(jnp.float32)


if __name__ == "__main__":
    key = jax.random.PRNGKey(0)
    kx, kp = jax.random.split(key)

    # Small, lane-dense shapes: dim multiple of 128; rows split into >=2 blocks.
    B, N, dim, hidden = 2, 8, 128, 512
    x = jax.random.normal(kx, (B, N, dim), jnp.float32)

    # f32 weights, default tiles -> weight-resident single-hidden-block path.
    params = init_params(kp, dim, hidden, jnp.float32)
    out = jax.block_until_ready(feed_forward(x, params))
    ref = _reference(x, params)
    assert out.shape == (B, N, dim)
    assert jnp.allclose(out, ref, atol=1e-3, rtol=1e-3), "mismatch (resident path)"

    # Force hidden tiling to exercise the accumulator path as well.
    out_t = jax.block_until_ready(feed_forward(x, params, hidden_tile=256))
    assert jnp.allclose(out_t, ref, atol=1e-3, rtol=1e-3), "mismatch (tiled path)"

    # bf16 weights: MXU-native path on v6e/v7x (smoke test; looser numerics).
    params_bf16 = {k: v.astype(jnp.bfloat16) for k, v in params.items()}
    out_bf16 = jax.block_until_ready(feed_forward(x, params_bf16))
    assert out_bf16.shape == (B, N, dim)
    assert bool(jnp.all(jnp.isfinite(out_bf16.astype(jnp.float32))))

    print("KERNEL_OK")
</pallas_src>

<mosaic_0001>
module attributes {stable_mosaic.version = 11 : i64} {
  func.func @_ff_kernel_resident(%arg0: i32, %arg1: memref<8x128xf32, #tpu.memory_space<vmem>>, %arg2: memref<1x128xf32, #tpu.memory_space<vmem>>, %arg3: memref<1x128xf32, #tpu.memory_space<vmem>>, %arg4: memref<128x512xf32, #tpu.memory_space<vmem>>, %arg5: memref<1x512xf32, #tpu.memory_space<vmem>>, %arg6: memref<512x128xf32, #tpu.memory_space<vmem>>, %arg7: memref<1x128xf32, #tpu.memory_space<vmem>>, %arg8: memref<8x128xf32, #tpu.memory_space<vmem>>) attributes {dimension_semantics = [#tpu.dimension_semantics<parallel>], iteration_bounds = array<i64: 2>, scalar_prefetch = 0 : i64, scratch_operands = 0 : i64, tpu.core_type = #tpu.core_type<tc>, window_params = [{transform_indices = @transform_0, window_bounds = array<i64: 8, 128>}, {pipeline_mode = #tpu.pipeline_mode<synchronous>, transform_indices = @transform_1, window_bounds = array<i64: 1, 128>}, {pipeline_mode = #tpu.pipeline_mode<synchronous>, transform_indices = @transform_2, window_bounds = array<i64: 1, 128>}, {pipeline_mode = #tpu.pipeline_mode<synchronous>, transform_indices = @transform_3, window_bounds = array<i64: 128, 512>}, {pipeline_mode = #tpu.pipeline_mode<synchronous>, transform_indices = @transform_4, window_bounds = array<i64: 1, 512>}, {pipeline_mode = #tpu.pipeline_mode<synchronous>, transform_indices = @transform_5, window_bounds = array<i64: 512, 128>}, {pipeline_mode = #tpu.pipeline_mode<synchronous>, transform_indices = @transform_6, window_bounds = array<i64: 1, 128>}, {transform_indices = @transform_7, window_bounds = array<i64: 8, 128>}]} {
    %c0 = arith.constant 0 : index
    %c0_0 = arith.constant 0 : index
    %0 = vector.load %arg1[%c0, %c0_0] : memref<8x128xf32, #tpu.memory_space<vmem>>, vector<8x128xf32>
    %cst = arith.constant dense<0.000000e+00> : vector<8xf32>
    %1 = vector.multi_reduction <add>, %0, %cst [1] : vector<8x128xf32> to vector<8xf32>
    %2 = vector.shape_cast %1 : vector<8xf32> to vector<8x1xf32>
    %cst_1 = arith.constant 1.280000e+02 : f32
    %3 = vector.broadcast %cst_1 : f32 to vector<8x1xf32>
    %4 = arith.divf %2, %3 : vector<8x1xf32>
    %5 = vector.broadcast %4 : vector<8x1xf32> to vector<8x128xf32>
    %6 = arith.subf %0, %5 : vector<8x128xf32>
    %7 = arith.mulf %6, %6 : vector<8x128xf32>
    %cst_2 = arith.constant dense<0.000000e+00> : vector<8xf32>
    %8 = vector.multi_reduction <add>, %7, %cst_2 [1] : vector<8x128xf32> to vector<8xf32>
    %9 = vector.shape_cast %8 : vector<8xf32> to vector<8x1xf32>
    %cst_3 = arith.constant 1.280000e+02 : f32
    %10 = vector.broadcast %cst_3 : f32 to vector<8x1xf32>
    %11 = arith.divf %9, %10 : vector<8x1xf32>
    %12 = vector.broadcast %4 : vector<8x1xf32> to vector<8x128xf32>
    %13 = arith.subf %0, %12 : vector<8x128xf32>
    %cst_4 = arith.constant 9.99999974E-6 : f32
    %14 = vector.broadcast %cst_4 : f32 to vector<8x1xf32>
    %15 = arith.addf %11, %14 : vector<8x1xf32>
    %16 = math.rsqrt %15 : vector<8x1xf32>
    %17 = vector.broadcast %16 : vector<8x1xf32> to vector<8x128xf32>
    %18 = arith.mulf %13, %17 : vector<8x128xf32>
    %c0_5 = arith.constant 0 : index
    %c0_6 = arith.constant 0 : index
    %19 = vector.load %arg2[%c0_5, %c0_6] : memref<1x128xf32, #tpu.memory_space<vmem>>, vector<1x128xf32>
    %20 = vector.broadcast %19 : vector<1x128xf32> to vector<8x128xf32>
    %21 = arith.mulf %18, %20 : vector<8x128xf32>
    %c0_7 = arith.constant 0 : index
    %c0_8 = arith.constant 0 : index
    %22 = vector.load %arg3[%c0_7, %c0_8] : memref<1x128xf32, #tpu.memory_space<vmem>>, vector<1x128xf32>
    %23 = vector.broadcast %22 : vector<1x128xf32> to vector<8x128xf32>
    %24 = arith.addf %21, %23 : vector<8x128xf32>
    %c0_9 = arith.constant 0 : index
    %c0_10 = arith.constant 0 : index
    %25 = vector.load %arg4[%c0_9, %c0_10] : memref<128x512xf32, #tpu.memory_space<vmem>>, vector<128x512xf32>
    %cst_11 = arith.constant dense<0.000000e+00> : vector<8x512xf32>
    %26 = tpu.matmul %24, %25, %cst_11 {dimension_numbers = #tpu.dot_dimension_numbers<[1], [0], [0], [1], [0, 0, 1, 1], [], []>} : vector<8x128xf32>, vector<128x512xf32>, vector<8x512xf32> -> vector<8x512xf32>
    %c0_12 = arith.constant 0 : index
    %c0_13 = arith.constant 0 : index
    %27 = vector.load %arg5[%c0_12, %c0_13] : memref<1x512xf32, #tpu.memory_space<vmem>>, vector<1x512xf32>
    %28 = vector.broadcast %27 : vector<1x512xf32> to vector<8x512xf32>
    %29 = arith.addf %26, %28 : vector<8x512xf32>
    %cst_14 = arith.constant 5.000000e-01 : f32
    %30 = vector.broadcast %cst_14 : f32 to vector<8x512xf32>
    %31 = arith.mulf %30, %29 : vector<8x512xf32>
    %cst_15 = arith.constant 0.707106769 : f32
    %32 = vector.broadcast %cst_15 : f32 to vector<8x512xf32>
    %33 = arith.mulf %29, %32 : vector<8x512xf32>
    %34 = math.erf %33 : vector<8x512xf32>
    %cst_16 = arith.constant 1.000000e+00 : f32
    %35 = vector.broadcast %cst_16 : f32 to vector<8x512xf32>
    %36 = arith.addf %35, %34 : vector<8x512xf32>
    %37 = arith.mulf %31, %36 : vector<8x512xf32>
    %c0_17 = arith.constant 0 : index
    %c0_18 = arith.constant 0 : index
    %38 = vector.load %arg6[%c0_17, %c0_18] : memref<512x128xf32, #tpu.memory_space<vmem>>, vector<512x128xf32>
    %cst_19 = arith.constant dense<0.000000e+00> : vector<8x128xf32>
    %39 = tpu.matmul %37, %38, %cst_19 {dimension_numbers = #tpu.dot_dimension_numbers<[1], [0], [0], [1], [0, 0, 1, 1], [], []>} : vector<8x512xf32>, vector<512x128xf32>, vector<8x128xf32> -> vector<8x128xf32>
    %c0_20 = arith.constant 0 : index
    %c0_21 = arith.constant 0 : index
    %40 = vector.load %arg7[%c0_20, %c0_21] : memref<1x128xf32, #tpu.memory_space<vmem>>, vector<1x128xf32>
    %41 = vector.broadcast %40 : vector<1x128xf32> to vector<8x128xf32>
    %42 = arith.addf %39, %41 : vector<8x128xf32>
    %c0_22 = arith.constant 0 : index
    %c0_23 = arith.constant 0 : index
    %43 = vector.load %arg8[%c0_22, %c0_23] : memref<8x128xf32, #tpu.memory_space<vmem>>, vector<8x128xf32>
    tpu.vector_store %arg8[%c0_22, %c0_23], %42 {strides = array<i32>} : memref<8x128xf32, #tpu.memory_space<vmem>>, vector<8x128xf32>,
    return
  }
  func.func @transform_0(%arg0: i32) -> (i32, i32) {
    %c0_i32 = arith.constant 0 : i32
    %c0_i32_0 = arith.constant 0 : i32
    return %arg0, %c0_i32 : i32, i32
  }
  func.func @transform_1(%arg0: i32) -> (i32, i32) {
    %c0_i32 = arith.constant 0 : i32
    %c0_i32_0 = arith.constant 0 : i32
    %c0_i32_1 = arith.constant 0 : i32
    return %c0_i32, %c0_i32_0 : i32, i32
  }
  func.func @transform_2(%arg0: i32) -> (i32, i32) {
    %c0_i32 = arith.constant 0 : i32
    %c0_i32_0 = arith.constant 0 : i32
    %c0_i32_1 = arith.constant 0 : i32
    return %c0_i32, %c0_i32_0 : i32, i32
  }
  func.func @transform_3(%arg0: i32) -> (i32, i32) {
    %c0_i32 = arith.constant 0 : i32
    %c0_i32_0 = arith.constant 0 : i32
    %c0_i32_1 = arith.constant 0 : i32
    return %c0_i32, %c0_i32_0 : i32, i32
  }
  func.func @transform_4(%arg0: i32) -> (i32, i32) {
    %c0_i32 = arith.constant 0 : i32
    %c0_i32_0 = arith.constant 0 : i32
    %c0_i32_1 = arith.constant 0 : i32
    return %c0_i32, %c0_i32_0 : i32, i32
  }
  func.func @transform_5(%arg0: i32) -> (i32, i32) {
    %c0_i32 = arith.constant 0 : i32
    %c0_i32_0 = arith.constant 0 : i32
    %c0_i32_1 = arith.constant 0 : i32
    return %c0_i32, %c0_i32_0 : i32, i32
  }
  func.func @transform_6(%arg0: i32) -> (i32, i32) {
    %c0_i32 = arith.constant 0 : i32
    %c0_i32_0 = arith.constant 0 : i32
    %c0_i32_1 = arith.constant 0 : i32
    return %c0_i32, %c0_i32_0 : i32, i32
  }
  func.func @transform_7(%arg0: i32) -> (i32, i32) {
    %c0_i32 = arith.constant 0 : i32
    %c0_i32_0 = arith.constant 0 : i32
    return %arg0, %c0_i32 : i32, i32
  }
}

</mosaic_0001>

<llo_original>
// kernel: tpu_custom_call.1
$region0: #{tpu_custom_call.1}
  #allocation0 [shape = 'u32[]', space=smem, size = 0x4, offset = 0x4, fixed_abs, tag = 'smem constant byte address 0x4 - core index']
  #allocation1 [shape = 'u32[144,128]{1,0:T(1,128)}', space=vmem, size = 0x12000, scoped, tag = 'internal scratch']
  %s0 = inlined_call_operand.hbm [shape: f32[16,128], index: 0, kind: input, shape index: {}]
  %s1 = inlined_call_operand.vmem [shape: f32[1,128], index: 1, kind: input, shape index: {}]
  %s2 = inlined_call_operand.vmem [shape: f32[1,128], index: 2, kind: input, shape index: {}]
  %s3 = inlined_call_operand.hbm [shape: f32[128,512], index: 3, kind: input, shape index: {}]
  %s4 = inlined_call_operand.vmem [shape: f32[1,512], index: 4, kind: input, shape index: {}]
  %s5 = inlined_call_operand.hbm [shape: f32[512,128], index: 5, kind: input, shape index: {}]
  %s6 = inlined_call_operand.vmem [shape: f32[1,128], index: 6, kind: input, shape index: {}]
  %s7 = inlined_call_operand.hbm [shape: f32[16,128], index: 7, kind: output, shape index: {}]
  %s8 = sld [smem:[#allocation0]]
  $region73: #{tpu_custom_call.1} parent=0
    _
  %s10 = ssub.s32 1, %s8
  %s11 = scalar_select 0, %s10, %s8
  $region1: #{tpu_custom_call.1} parent=0
    #allocation2 [shape = 'u8[8192]{0}', space=vmem, size = 0x2000, scoped, tag = 'input window, operand 0']
    #allocation3 [shape = 's32[2]{0}', space=sflag, size = 0x8, scoped, tag = 'scoped memory for tpu_custom_call.1']
    #allocation4 [shape = 's32[2]{0}', space=sflag, size = 0x8, scoped, tag = 'scoped memory for tpu_custom_call.1']
    #allocation5 [shape = 'u8[262144]{0}', space=vmem, size = 0x40000, scoped, tag = 'input window, operand 3, single buffered']
    #allocation6 [shape = 's32[1]{0}', space=sflag, size = 0x4, scoped, tag = 'scoped memory for tpu_custom_call.1']
    #allocation7 [shape = 'u8[262144]{0}', space=vmem, size = 0x40000, scoped, tag = 'input window, operand 5, single buffered']
    #allocation8 [shape = 'u8[8192]{0}', space=vmem, size = 0x2000, scoped, tag = 'output window, operand 0']
    %12 = vsyncpa [#allocation3], 0
    %s13 = scalar_lea.sflag [#allocation3], 1
    %14 = vsyncpa %s13, 0
    %15 = vsyncpa [#allocation6], 0
    %16 = vsyncpa [#allocation4], 0
    %s17 = scalar_lea.sflag [#allocation4], 1
    %18 = vsyncpa %s17, 0
    loop: start=0, step=1, limit=4
    $region2: #{tpu_custom_call.1} parent=1 // loop_pre_header
      _
    $region3: #{tpu_custom_call.1} parent=1 // loop_header
      %s20 = sphi 0, %s24
      %p21 = scmp.ge.s32.totalorder %s20, 4
      %s30 = sphi 0, %s32
      %s33 = sphi 0, %s30
      %s34 = sphi 0, %s33
      %s50 = sphi 0, %s34
      %s54 = sphi 0, %s54
      %s56 = sphi 0, %s54
      %s57 = sphi 0, %s56
      %s71 = sphi 0, %s57
      %s75 = sphi 0, %s75
      %s77 = sphi 0, %s75
      %s78 = sphi 0, %s77
      %s92 = sphi 0, %s78
      %s96 = sphi 0, %s96
      %s98 = sphi 0, %s96
      %s99 = sphi 0, %s98
      %s113 = sphi 0, %s99
      %s117 = sphi 0, %s117
      %s119 = sphi 0, %s117
      %s120 = sphi 0, %s119
      %s134 = sphi 0, %s120
      %s138 = sphi 0, %s138
      %s140 = sphi 0, %s138
      %s141 = sphi 0, %s140
      %s155 = sphi 0, %s141
      %s159 = sphi 0, %s159
      %s161 = sphi 0, %s159
      %s162 = sphi 0, %s161
      %s176 = sphi 0, %s162
      %s182 = sphi 0, %s184
      %s185 = sphi 0, %s182
      %s186 = sphi 0, %s185
      %s202 = sphi 0, %s186
    $region4: #{tpu_custom_call.1} parent=1 // loop_header_branch
      %23 = sbr.rel (%p21) target = $region8
    $region5: #{tpu_custom_call.1} parent=1 // loop_body
      %s25 = ssub.s32 %s20, 1
      %s26 = ssub.s32 %s20, 2
      %s27 = sadd.s32 %s20, 1
      %s28 = ssub.s32 %s20, %s27
      %p29 = scmp.eq.s32.totalorder %s28, 0
      %s31 = sadd.s32 %s30, 1
      %s32 = scalar_select %p29, %s30, %s31
      %p35 = pneg %p29
      %p36 = scmp.eq.s32.totalorder %s20, 1
      %p37 = por %p35, %p36
      %p38 = scmp.ne.s32.totalorder %s30, %s33
      %p39 = scmp.eq.s32.totalorder %s20, 0
      %p40 = por %p38, %p39
      %p41 = scmp.ne.s32.totalorder %s30, %s33
      %p42 = scmp.eq.s32.totalorder %s25, 1
      %p43 = por %p41, %p42
      %p44 = scmp.ne.s32.totalorder %s33, %s34
      %p45 = scmp.eq.s32.totalorder %s25, 0
      %p46 = por %p44, %p45
      %p47 = scmp.ne.s32.totalorder %s33, %s34
      %p48 = scmp.eq.s32.totalorder %s26, 1
      %p49 = por %p47, %p48
      %p51 = scmp.ne.s32.totalorder %s34, %s50
      %p52 = scmp.eq.s32.totalorder %s26, 0
      %p53 = por %p51, %p52
      %s55 = sadd.s32 %s54, 1
      %p58 = scmp.eq.s32.totalorder %s20, 1
      %p59 = scmp.ne.s32.totalorder %s54, %s56
      %p60 = scmp.eq.s32.totalorder %s20, 0
      %p61 = por %p59, %p60
      %p62 = scmp.ne.s32.totalorder %s54, %s56
      %p63 = scmp.eq.s32.totalorder %s25, 1
      %p64 = por %p62, %p63
      %p65 = scmp.ne.s32.totalorder %s56, %s57
      %p66 = scmp.eq.s32.totalorder %s25, 0
      %p67 = por %p65, %p66
      %p68 = scmp.ne.s32.totalorder %s56, %s57
      %p69 = scmp.eq.s32.totalorder %s26, 1
      %p70 = por %p68, %p69
      %p72 = scmp.ne.s32.totalorder %s57, %s71
      %p73 = scmp.eq.s32.totalorder %s26, 0
      %p74 = por %p72, %p73
      %s76 = sadd.s32 %s75, 1
      %p79 = scmp.eq.s32.totalorder %s20, 1
      %p80 = scmp.ne.s32.totalorder %s75, %s77
      %p81 = scmp.eq.s32.totalorder %s20, 0
      %p82 = por %p80, %p81
      %p83 = scmp.ne.s32.totalorder %s75, %s77
      %p84 = scmp.eq.s32.totalorder %s25, 1
      %p85 = por %p83, %p84
      %p86 = scmp.ne.s32.totalorder %s77, %s78
      %p87 = scmp.eq.s32.totalorder %s25, 0
      %p88 = por %p86, %p87
      %p89 = scmp.ne.s32.totalorder %s77, %s78
      %p90 = scmp.eq.s32.totalorder %s26, 1
      %p91 = por %p89, %p90
      %p93 = scmp.ne.s32.totalorder %s78, %s92
      %p94 = scmp.eq.s32.totalorder %s26, 0
      %p95 = por %p93, %p94
      %s97 = sadd.s32 %s96, 1
      %p100 = scmp.eq.s32.totalorder %s20, 1
      %p101 = scmp.ne.s32.totalorder %s96, %s98
      %p102 = scmp.eq.s32.totalorder %s20, 0
      %p103 = por %p101, %p102
      %p104 = scmp.ne.s32.totalorder %s96, %s98
      %p105 = scmp.eq.s32.totalorder %s25, 1
      %p106 = por %p104, %p105
      %p107 = scmp.ne.s32.totalorder %s98, %s99
      %p108 = scmp.eq.s32.totalorder %s25, 0
      %p109 = por %p107, %p108
      %p110 = scmp.ne.s32.totalorder %s98, %s99
      %p111 = scmp.eq.s32.totalorder %s26, 1
      %p112 = por %p110, %p111
      %p114 = scmp.ne.s32.totalorder %s99, %s113
      %p115 = scmp.eq.s32.totalorder %s26, 0
      %p116 = por %p114, %p115
      %s118 = sadd.s32 %s117, 1
      %p121 = scmp.eq.s32.totalorder %s20, 1
      %p122 = scmp.ne.s32.totalorder %s117, %s119
      %p123 = scmp.eq.s32.totalorder %s20, 0
      %p124 = por %p122, %p123
      %p125 = scmp.ne.s32.totalorder %s117, %s119
      %p126 = scmp.eq.s32.totalorder %s25, 1
      %p127 = por %p125, %p126
      %p128 = scmp.ne.s32.totalorder %s119, %s120
      %p129 = scmp.eq.s32.totalorder %s25, 0
      %p130 = por %p128, %p129
      %p131 = scmp.ne.s32.totalorder %s119, %s120
      %p132 = scmp.eq.s32.totalorder %s26, 1
      %p133 = por %p131, %p132
      %p135 = scmp.ne.s32.totalorder %s120, %s134
      %p136 = scmp.eq.s32.totalorder %s26, 0
      %p137 = por %p135, %p136
      %s139 = sadd.s32 %s138, 1
      %p142 = scmp.eq.s32.totalorder %s20, 1
      %p143 = scmp.ne.s32.totalorder %s138, %s140
      %p144 = scmp.eq.s32.totalorder %s20, 0
      %p145 = por %p143, %p144
      %p146 = scmp.ne.s32.totalorder %s138, %s140
      %p147 = scmp.eq.s32.totalorder %s25, 1
      %p148 = por %p146, %p147
      %p149 = scmp.ne.s32.totalorder %s140, %s141
      %p150 = scmp.eq.s32.totalorder %s25, 0
      %p151 = por %p149, %p150
      %p152 = scmp.ne.s32.totalorder %s140, %s141
      %p153 = scmp.eq.s32.totalorder %s26, 1
      %p154 = por %p152, %p153
      %p156 = scmp.ne.s32.totalorder %s141, %s155
      %p157 = scmp.eq.s32.totalorder %s26, 0
      %p158 = por %p156, %p157
      %s160 = sadd.s32 %s159, 1
      %p163 = scmp.eq.s32.totalorder %s20, 1
      %p164 = scmp.ne.s32.totalorder %s159, %s161
      %p165 = scmp.eq.s32.totalorder %s20, 0
      %p166 = por %p164, %p165
      %p167 = scmp.ne.s32.totalorder %s159, %s161
      %p168 = scmp.eq.s32.totalorder %s25, 1
      %p169 = por %p167, %p168
      %p170 = scmp.ne.s32.totalorder %s161, %s162
      %p171 = scmp.eq.s32.totalorder %s25, 0
      %p172 = por %p170, %p171
      %p173 = scmp.ne.s32.totalorder %s161, %s162
      %p174 = scmp.eq.s32.totalorder %s26, 1
      %p175 = por %p173, %p174
      %p177 = scmp.ne.s32.totalorder %s162, %s176
      %p178 = scmp.eq.s32.totalorder %s26, 0
      %p179 = por %p177, %p178
      %s180 = ssub.s32 %s20, %s27
      %p181 = scmp.eq.s32.totalorder %s180, 0
      %s183 = sadd.s32 %s182, 1
      %s184 = scalar_select %p181, %s182, %s183
      %p187 = pneg %p181
      %p188 = scmp.eq.s32.totalorder %s20, 1
      %p189 = por %p187, %p188
      %p190 = scmp.ne.s32.totalorder %s182, %s185
      %p191 = scmp.eq.s32.totalorder %s20, 0
      %p192 = por %p190, %p191
      %p193 = scmp.ne.s32.totalorder %s182, %s185
      %p194 = scmp.eq.s32.totalorder %s25, 1
      %p195 = por %p193, %p194
      %p196 = scmp.ne.s32.totalorder %s185, %s186
      %p197 = scmp.eq.s32.totalorder %s25, 0
      %p198 = por %p196, %p197
      %p199 = scmp.ne.s32.totalorder %s185, %s186
      %p200 = scmp.eq.s32.totalorder %s26, 1
      %p201 = por %p199, %p200
      %p203 = scmp.ne.s32.totalorder %s186, %s202
      %p204 = scmp.eq.s32.totalorder %s26, 0
      %p205 = por %p203, %p204
      %p206 = scmp.le.s32.totalorder 1, %s20
      %p207 = scmp.lt.s32.totalorder %s20, 3
      %p208 = pnand %p206, %p207
      %p209 = pneg %p208
      // Predicated region
      $region9: #{tpu_custom_call.1} parent=5 // pred_check
        _
      $region10: #{tpu_custom_call.1} parent=5 // pred_check_branch
        %211 = sbr.rel (%p208) target = $region12
      $region11: #{tpu_custom_call.1} parent=5 // pred_region
        %s212 = ssub.s32 %s20, 1
        // Predicated region
        $region13: #{tpu_custom_call.1} parent=11 // pred_check
          %p213 = pneg %p67
        $region14: #{tpu_custom_call.1} parent=11 // pred_check_branch
          %215 = sbr.rel (%p213) target = $region16
        $region15: #{tpu_custom_call.1} parent=11 // pred_region
          _
        $region16: #{tpu_custom_call.1} parent=11 // pred_fallthru
          _
        // Predicated region
        $region17: #{tpu_custom_call.1} parent=11 // pred_check
          %p216 = pneg %p88
        $region18: #{tpu_custom_call.1} parent=11 // pred_check_branch
          %218 = sbr.rel (%p216) target = $region20
        $region19: #{tpu_custom_call.1} parent=11 // pred_region
          _
        $region20: #{tpu_custom_call.1} parent=11 // pred_fallthru
          _
        // Predicated region
        $region21: #{tpu_custom_call.1} parent=11 // pred_check
          %p219 = pneg %p109
        $region22: #{tpu_custom_call.1} parent=11 // pred_check_branch
          %221 = sbr.rel (%p219) target = $region24
        $region23: #{tpu_custom_call.1} parent=11 // pred_region
          %s223 = ssub.s32 8192, 8192
          %224 = vsyncadd [#allocation6], %s223
          %s225 = sshll.u32 [#allocation5], 4
          %s226 = int_to_ptr.vmem [resolvable:$true] %s225
          %231 = dma.hbm_to_vmem [thread:$0]  %s3, 8192, %s226, [#allocation6], 512, 512, 32
        $region24: #{tpu_custom_call.1} parent=11 // pred_fallthru
          _
        // Predicated region
        $region25: #{tpu_custom_call.1} parent=11 // pred_check
          %p232 = pneg %p130
        $region26: #{tpu_custom_call.1} parent=11 // pred_check_branch
          %234 = sbr.rel (%p232) target = $region28
        $region27: #{tpu_custom_call.1} parent=11 // pred_region
          _
        $region28: #{tpu_custom_call.1} parent=11 // pred_fallthru
          _
        // Predicated region
        $region29: #{tpu_custom_call.1} parent=11 // pred_check
          %p235 = pneg %p151
        $region30: #{tpu_custom_call.1} parent=11 // pred_check_branch
          %237 = sbr.rel (%p235) target = $region32
        $region31: #{tpu_custom_call.1} parent=11 // pred_region
          %s239 = ssub.s32 8192, 8192
          %240 = vsyncadd [#allocation6], %s239
          %s241 = sshll.u32 [#allocation7], 4
          %s242 = int_to_ptr.vmem [resolvable:$true] %s241
          %247 = dma.hbm_to_vmem [thread:$0]  %s5, 8192, %s242, [#allocation6], 128, 128, 8
        $region32: #{tpu_custom_call.1} parent=11 // pred_fallthru
          _
        // Predicated region
        $region33: #{tpu_custom_call.1} parent=11 // pred_check
          %p248 = pneg %p172
        $region34: #{tpu_custom_call.1} parent=11 // pred_check_branch
          %250 = sbr.rel (%p248) target = $region36
        $region35: #{tpu_custom_call.1} parent=11 // pred_region
          _
        $region36: #{tpu_custom_call.1} parent=11 // pred_fallthru
          _
      $region12: #{tpu_custom_call.1} parent=5 // pred_fallthru
        _
      %p251 = scmp.lt.s32.totalorder %s20, 2
      // Predicated region
      $region37: #{tpu_custom_call.1} parent=5 // pred_check
        %p252 = pneg %p251
      $region38: #{tpu_custom_call.1} parent=5 // pred_check_branch
        %254 = sbr.rel (%p252) target = $region40
      $region39: #{tpu_custom_call.1} parent=5 // pred_region
        // Predicated region
        $region41: #{tpu_custom_call.1} parent=39 // pred_check
          %p255 = pneg %p40
        $region42: #{tpu_custom_call.1} parent=39 // pred_check_branch
          %257 = sbr.rel (%p255) target = $region44
        $region43: #{tpu_custom_call.1} parent=39 // pred_region
          %s258 = sand.u32 %s30, 1
          %s259 = scalar_lea.sflag [#allocation3], %s258
          %s260 = sand.u32 %s30, 1
          %s261 = smul.addr %s260, 8
          %s262 = scalar_lea.vmem [#allocation2], %s261
          %s264 = ssub.s32 128, 128
          %265 = vsyncadd %s259, %s264
          %s266 = smul.addr %s20, 128
          %s267 = scalar_lea.hbm %s0, %s266
          %s269 = sshll.u32 %s262, 4
          %s270 = int_to_ptr.vmem [resolvable:$true] %s269
          %272 = dma.hbm_to_vmem [thread:$0]  %s267, 128, %s270, %s259
        $region44: #{tpu_custom_call.1} parent=39 // pred_fallthru
          _
      $region40: #{tpu_custom_call.1} parent=5 // pred_fallthru
        _
      %p273 = scmp.le.s32.totalorder 1, %s20
      %p274 = scmp.lt.s32.totalorder %s20, 3
      %p275 = pnand %p273, %p274
      %p276 = pneg %p275
      // Predicated region
      $region45: #{tpu_custom_call.1} parent=5 // pred_check
        _
      $region46: #{tpu_custom_call.1} parent=5 // pred_check_branch
        %278 = sbr.rel (%p275) target = $region48
      $region47: #{tpu_custom_call.1} parent=5 // pred_region
        %s279 = ssub.s32 %s20, 1
        %s280 = sand.u32 %s33, 1
        %s281 = scalar_lea.sflag [#allocation3], %s280
        %s282 = sand.u32 %s33, 1
        %s283 = smul.addr %s282, 8
        %s284 = scalar_lea.vmem [#allocation2], %s283
        // Predicated region
        $region49: #{tpu_custom_call.1} parent=47 // pred_check
          %p285 = pneg %p46
        $region50: #{tpu_custom_call.1} parent=47 // pred_check_branch
          %287 = sbr.rel (%p285) target = $region52
        $region51: #{tpu_custom_call.1} parent=47 // pred_region
          %288 = dma.done %s281, 128
        $region52: #{tpu_custom_call.1} parent=47 // pred_fallthru
          _
        // Predicated region
        $region53: #{tpu_custom_call.1} parent=47 // pred_check
          %p289 = pneg %p109
        $region54: #{tpu_custom_call.1} parent=47 // pred_check_branch
          %291 = sbr.rel (%p289) target = $region56
        $region55: #{tpu_custom_call.1} parent=47 // pred_region
          %292 = dma.done [#allocation6], 8192
        $region56: #{tpu_custom_call.1} parent=47 // pred_fallthru
          _
        // Predicated region
        $region57: #{tpu_custom_call.1} parent=47 // pred_check
          %p293 = pneg %p151
        $region58: #{tpu_custom_call.1} parent=47 // pred_check_branch
          %295 = sbr.rel (%p293) target = $region60
        $region59: #{tpu_custom_call.1} parent=47 // pred_region
          %296 = dma.done [#allocation6], 8192
        $region60: #{tpu_custom_call.1} parent=47 // pred_fallthru
          _
        %s297 = sand.u32 %s33, 1
        %s298 = scalar_lea.sflag [#allocation3], %s297
        %s299 = sand.u32 %s33, 1
        %s300 = smul.addr %s299, 8
        %s301 = scalar_lea.vmem [#allocation2], %s300
        %p302 = pneg %p46
        %p303 = pneg %p43
        %p304 = pneg %p67
        %p305 = pneg %p64
        %p306 = pneg %p88
        %p307 = pneg %p85
        %p308 = pneg %p109
        %p309 = pneg %p106
        %p310 = pneg %p130
        %p311 = pneg %p127
        %p312 = pneg %p151
        %p313 = pneg %p148
        %p314 = pneg %p172
        %p315 = pneg %p169
        %p316 = pneg %p198
        %p317 = pneg %p195
        %s318 = sand.u32 %s185, 1
        %s319 = scalar_lea.sflag [#allocation4], %s318
        %s320 = sand.u32 %s185, 1
        %s321 = smul.addr %s320, 8
        %s322 = scalar_lea.vmem [#allocation8], %s321
        %v323 = vld [vmem:[%s284] sm:$0xff]
        %324 = vadd.xlane.f32.xlu0 %v323
        %v325 = vpop.xlane.xlu0 %324
        %v326 = vrcp.pop 128.0
        %v327 = vmul.f32 %v325, %v326
        %v328 = vsub.f32 %v323, %v327
        %v329 = vmul.f32 %v328, %v328
        %330 = vadd.xlane.f32.xlu0 %v329
        %v331 = vpop.xlane.xlu0 %330
        %v332 = vmul.f32 %v331, %v326
        %v333 = vadd.f32 %v332, 1e-05
        %v334 = vrsqrt.pop %v333
        %v335 = vmul.f32 %v328, %v334
        %v336 = vld [vmem:[%s1] sm:$0x1]
        %v338 = vlaneseq
        %v339 = vshrl.u32 %v338, 7
        %v340 = vsub.s32 0, %v339
        %v341 = vrot.slane %v336, %v340
        %v343 = vmul.f32 %v335, %v341
        %v344 = vld [vmem:[%s2] sm:$0x1]
        %v346 = vlaneseq
        %v347 = vshrl.u32 %v346, 7
        %v348 = vsub.s32 0, %v347
        %v349 = vrot.slane %v344, %v348
        %v351 = vadd.f32 %v343, %v349
        %v352 = vld [vmem:[#allocation5] sm:$0xff]
        %v353 = vld [vmem:[#allocation5 + $0x8] sm:$0xff]
        %v354 = vld [vmem:[#allocation5 + $0x10] sm:$0xff]
        %v355 = vld [vmem:[#allocation5 + $0x18] sm:$0xff]
        %v356 = vld [vmem:[#allocation5 + $0x20] sm:$0xff]
        %v357 = vld [vmem:[#allocation5 + $0x28] sm:$0xff]
        %v358 = vld [vmem:[#allocation5 + $0x30] sm:$0xff]
        %v359 = vld [vmem:[#allocation5 + $0x38] sm:$0xff]
        %v360 = vld [vmem:[#allocation5 + $0x40] sm:$0xff]
        %v361 = vld [vmem:[#allocation5 + $0x48] sm:$0xff]
        %v362 = vld [vmem:[#allocation5 + $0x50] sm:$0xff]
        %v363 = vld [vmem:[#allocation5 + $0x58] sm:$0xff]
        %v364 = vld [vmem:[#allocation5 + $0x60] sm:$0xff]
        %v365 = vld [vmem:[#allocation5 + $0x68] sm:$0xff]
        %v366 = vld [vmem:[#allocation5 + $0x70] sm:$0xff]
        %v367 = vld [vmem:[#allocation5 + $0x78] sm:$0xff]
        %v368 = vld [vmem:[#allocation5 + $0x80] sm:$0xff]
        %v369 = vld [vmem:[#allocation5 + $0x88] sm:$0xff]
        %v370 = vld [vmem:[#allocation5 + $0x90] sm:$0xff]
        %v371 = vld [vmem:[#allocation5 + $0x98] sm:$0xff]
        %v372 = vld [vmem:[#allocation5 + $0xa0] sm:$0xff]
        %v373 = vld [vmem:[#allocation5 + $0xa8] sm:$0xff]
        %v374 = vld [vmem:[#allocation5 + $0xb0] sm:$0xff]
        %v375 = vld [vmem:[#allocation5 + $0xb8] sm:$0xff]
        %v376 = vld [vmem:[#allocation5 + $0xc0] sm:$0xff]
        %v377 = vld [vmem:[#allocation5 + $0xc8] sm:$0xff]
        %v378 = vld [vmem:[#allocation5 + $0xd0] sm:$0xff]
        %v379 = vld [vmem:[#allocation5 + $0xd8] sm:$0xff]
        %v380 = vld [vmem:[#allocation5 + $0xe0] sm:$0xff]
        %v381 = vld [vmem:[#allocation5 + $0xe8] sm:$0xff]
        %v382 = vld [vmem:[#allocation5 + $0xf0] sm:$0xff]
        %v383 = vld [vmem:[#allocation5 + $0xf8] sm:$0xff]
        %v384 = vld [vmem:[#allocation5 + $0x100] sm:$0xff]
        %v385 = vld [vmem:[#allocation5 + $0x108] sm:$0xff]
        %v386 = vld [vmem:[#allocation5 + $0x110] sm:$0xff]
        %v387 = vld [vmem:[#allocation5 + $0x118] sm:$0xff]
        %v388 = vld [vmem:[#allocation5 + $0x120] sm:$0xff]
        %v389 = vld [vmem:[#allocation5 + $0x128] sm:$0xff]
        %v390 = vld [vmem:[#allocation5 + $0x130] sm:$0xff]
        %v391 = vld [vmem:[#allocation5 + $0x138] sm:$0xff]
        %v392 = vld [vmem:[#allocation5 + $0x140] sm:$0xff]
        %v393 = vld [vmem:[#allocation5 + $0x148] sm:$0xff]
        %v394 = vld [vmem:[#allocation5 + $0x150] sm:$0xff]
        %v395 = vld [vmem:[#allocation5 + $0x158] sm:$0xff]
        %v396 = vld [vmem:[#allocation5 + $0x160] sm:$0xff]
        %v397 = vld [vmem:[#allocation5 + $0x168] sm:$0xff]
        %v398 = vld [vmem:[#allocation5 + $0x170] sm:$0xff]
        %v399 = vld [vmem:[#allocation5 + $0x178] sm:$0xff]
        %v400 = vld [vmem:[#allocation5 + $0x180] sm:$0xff]
        %v401 = vld [vmem:[#allocation5 + $0x188] sm:$0xff]
        %v402 = vld [vmem:[#allocation5 + $0x190] sm:$0xff]
        %v403 = vld [vmem:[#allocation5 + $0x198] sm:$0xff]
        %v404 = vld [vmem:[#allocation5 + $0x1a0] sm:$0xff]
        %v405 = vld [vmem:[#allocation5 + $0x1a8] sm:$0xff]
        %v406 = vld [vmem:[#allocation5 + $0x1b0] sm:$0xff]
        %v407 = vld [vmem:[#allocation5 + $0x1b8] sm:$0xff]
        %v408 = vld [vmem:[#allocation5 + $0x1c0] sm:$0xff]
        %v409 = vld [vmem:[#allocation5 + $0x1c8] sm:$0xff]
        %v410 = vld [vmem:[#allocation5 + $0x1d0] sm:$0xff]
        %v411 = vld [vmem:[#allocation5 + $0x1d8] sm:$0xff]
        %v412 = vld [vmem:[#allocation5 + $0x1e0] sm:$0xff]
        %v413 = vld [vmem:[#allocation5 + $0x1e8] sm:$0xff]
        %v414 = vld [vmem:[#allocation5 + $0x1f0] sm:$0xff]
        %v415 = vld [vmem:[#allocation5 + $0x1f8] sm:$0xff]
        %v416 = vld [vmem:[%s4] sm:$0xf]
        %v418 = vlaneseq
        %v419 = vshrl.u32 %v418, 7
        %v420 = vsub.s32 0, %v419
        %v421 = vrot.slane %v416, %v420
        %v422 = vlaneseq
        %v423 = vshrl.u32 %v422, 7
        %v424 = vsub.s32 1, %v423
        %v425 = vrot.slane %v416, %v424
        %v426 = vlaneseq
        %v427 = vshrl.u32 %v426, 7
        %v428 = vsub.s32 2, %v427
        %v429 = vrot.slane %v416, %v428
        %v430 = vlaneseq
        %v431 = vshrl.u32 %v430, 7
        %v432 = vsub.s32 3, %v431
        %v433 = vrot.slane %v416, %v432
        %438 = vmatprep.subr.mxu0 %v353
        %439 = vmatpush1.msra.mxu0 %v352
        %440 = vmatprep.subr.mxu0 %v357
        %441 = vmatpush1.msra.mxu0 %v356
        %442 = vmatprep.subr.mxu0 %v361
        %443 = vmatpush1.msra.mxu0 %v360
        %444 = vmatprep.subr.mxu0 %v365
        %445 = vmatpush1.msra.mxu0 %v364
        %446 = vmatprep.subr.mxu0 %v369
        %447 = vmatpush1.msra.mxu0 %v368
        %448 = vmatprep.subr.mxu0 %v373
        %449 = vmatpush1.msra.mxu0 %v372
        %450 = vmatprep.subr.mxu0 %v377
        %451 = vmatpush1.msra.mxu0 %v376
        %452 = vmatprep.subr.mxu0 %v381
        %453 = vmatpush1.msra.mxu0 %v380
        %454 = vmatprep.subr.mxu0 %v385
        %455 = vmatpush1.msra.mxu0 %v384
        %456 = vmatprep.subr.mxu0 %v389
        %457 = vmatpush1.msra.mxu0 %v388
        %458 = vmatprep.subr.mxu0 %v393
        %459 = vmatpush1.msra.mxu0 %v392
        %460 = vmatprep.subr.mxu0 %v397
        %461 = vmatpush1.msra.mxu0 %v396
        %462 = vmatprep.subr.mxu0 %v401
        %463 = vmatpush1.msra.mxu0 %v400
        %464 = vmatprep.subr.mxu0 %v405
        %465 = vmatpush1.msra.mxu0 %v404
        %466 = vmatprep.subr.mxu0 %v409
        %467 = vmatpush1.msra.mxu0 %v408
        %468 = vmatprep.subr.mxu0 %v413
        %469 = vmatpush1.msra.mxu0 %v412
        %470 = vmatprep.subr.mxu0 0.0
        %471 = vmatpush1.msra.mxu0 0.0
        %472 = vmatprep.subr.mxu0 0.0
        %473 = vmatpush1.msra.mxu0 0.0
        %474 = vmatprep.subr.mxu0 0.0
        %475 = vmatpush1.msra.mxu0 0.0
        %476 = vmatprep.subr.mxu0 0.0
        %477 = vmatpush1.msra.mxu0 0.0
        %478 = vmatprep.subr.mxu0 0.0
        %479 = vmatpush1.msra.mxu0 0.0
        %480 = vmatprep.subr.mxu0 0.0
        %481 = vmatpush1.msra.mxu0 0.0
        %482 = vmatprep.subr.mxu0 0.0
        %483 = vmatpush1.msra.mxu0 0.0
        %484 = vmatprep.subr.mxu0 0.0
        %485 = vmatpush1.msra.mxu0 0.0
        %486 = vmatprep.subr.mxu0 0.0
        %487 = vmatpush1.msra.mxu0 0.0
        %488 = vmatprep.subr.mxu0 0.0
        %489 = vmatpush1.msra.mxu0 0.0
        %490 = vmatprep.subr.mxu0 0.0
        %491 = vmatpush1.msra.mxu0 0.0
        %492 = vmatprep.subr.mxu0 0.0
        %493 = vmatpush1.msra.mxu0 0.0
        %494 = vmatprep.subr.mxu0 0.0
        %495 = vmatpush1.msra.mxu0 0.0
        %496 = vmatprep.subr.mxu0 0.0
        %497 = vmatpush1.msra.mxu0 0.0
        %498 = vmatprep.subr.mxu0 0.0
        %499 = vmatpush1.msra.mxu0 0.0
        %500 = vmatprep.subr.mxu0 0.0
        %501 = vmatpush1.msra.mxu0 0.0
        %502 = vmatprep.mubr.f32.mxu0 0.0
        %503 = vmatmul.mubr.f32.gmra.mrb[0].mxu0 %v351
        %v504 = vpop.f32.mrb[0].mxu0
        %v505 = vadd.f32 %v421, %v504
        %v506 = vpop.f32.mrb[0].mxu0
        %v507 = vadd.f32 %v425, %v506
        %508 = vdwg.mxu0
        %509 = vmatprep.subr.mxu0 %v355
        %510 = vmatpush1.msra.mxu0 %v354
        %511 = vmatprep.subr.mxu0 %v359
        %512 = vmatpush1.msra.mxu0 %v358
        %513 = vmatprep.subr.mxu0 %v363
        %514 = vmatpush1.msra.mxu0 %v362
        %515 = vmatprep.subr.mxu0 %v367
        %516 = vmatpush1.msra.mxu0 %v366
        %517 = vmatprep.subr.mxu0 %v371
        %518 = vmatpush1.msra.mxu0 %v370
        %519 = vmatprep.subr.mxu0 %v375
        %520 = vmatpush1.msra.mxu0 %v374
        %521 = vmatprep.subr.mxu0 %v379
        %522 = vmatpush1.msra.mxu0 %v378
        %523 = vmatprep.subr.mxu0 %v383
        %524 = vmatpush1.msra.mxu0 %v382
        %525 = vmatprep.subr.mxu0 %v387
        %526 = vmatpush1.msra.mxu0 %v386
        %527 = vmatprep.subr.mxu0 %v391
        %528 = vmatpush1.msra.mxu0 %v390
        %529 = vmatprep.subr.mxu0 %v395
        %530 = vmatpush1.msra.mxu0 %v394
        %531 = vmatprep.subr.mxu0 %v399
        %532 = vmatpush1.msra.mxu0 %v398
        %533 = vmatprep.subr.mxu0 %v403
        %534 = vmatpush1.msra.mxu0 %v402
        %535 = vmatprep.subr.mxu0 %v407
        %536 = vmatpush1.msra.mxu0 %v406
        %537 = vmatprep.subr.mxu0 %v411
        %538 = vmatpush1.msra.mxu0 %v410
        %539 = vmatprep.subr.mxu0 %v415
        %540 = vmatpush1.msra.mxu0 %v414
        %541 = vmatprep.subr.mxu0 0.0
        %542 = vmatpush1.msra.mxu0 0.0
        %543 = vmatprep.subr.mxu0 0.0
        %544 = vmatpush1.msra.mxu0 0.0
        %545 = vmatprep.subr.mxu0 0.0
        %546 = vmatpush1.msra.mxu0 0.0
        %547 = vmatprep.subr.mxu0 0.0
        %548 = vmatpush1.msra.mxu0 0.0
        %549 = vmatprep.subr.mxu0 0.0
        %550 = vmatpush1.msra.mxu0 0.0
        %551 = vmatprep.subr.mxu0 0.0
        %552 = vmatpush1.msra.mxu0 0.0
        %553 = vmatprep.subr.mxu0 0.0
        %554 = vmatpush1.msra.mxu0 0.0
        %555 = vmatprep.subr.mxu0 0.0
        %556 = vmatpush1.msra.mxu0 0.0
        %557 = vmatprep.subr.mxu0 0.0
        %558 = vmatpush1.msra.mxu0 0.0
        %559 = vmatprep.subr.mxu0 0.0
        %560 = vmatpush1.msra.mxu0 0.0
        %561 = vmatprep.subr.mxu0 0.0
        %562 = vmatpush1.msra.mxu0 0.0
        %563 = vmatprep.subr.mxu0 0.0
        %564 = vmatpush1.msra.mxu0 0.0
        %565 = vmatprep.subr.mxu0 0.0
        %566 = vmatpush1.msra.mxu0 0.0
        %567 = vmatprep.subr.mxu0 0.0
        %568 = vmatpush1.msra.mxu0 0.0
        %569 = vmatprep.subr.mxu0 0.0
        %570 = vmatpush1.msra.mxu0 0.0
        %571 = vmatprep.subr.mxu0 0.0
        %572 = vmatpush1.msra.mxu0 0.0
        %573 = vmatprep.mubr.f32.mxu0 0.0
        %574 = vmatmul.mubr.f32.gmra.mrb[0].mxu0 %v351
        %v575 = vpop.f32.mrb[0].mxu0
        %v576 = vadd.f32 %v429, %v575
        %v577 = vpop.f32.mrb[0].mxu0
        %v578 = vadd.f32 %v433, %v577
        %579 = vdwg.mxu0
        %v580 = vmul.f32 %v505, 0.5
        %v581 = vmul.f32 %v507, 0.5
        %v582 = vmul.f32 %v576, 0.5
        %v583 = vmul.f32 %v578, 0.5
        %v584 = vmul.f32 %v505, 0.70710677
        %v585 = vmul.f32 %v507, 0.70710677
        %v586 = vmul.f32 %v576, 0.70710677
        %v587 = vmul.f32 %v578, 0.70710677
        %v588 = verf.f32.pop %v584
        %v589 = verf.f32.pop %v585
        %v590 = verf.f32.pop %v586
        %v591 = verf.f32.pop %v587
        %v592 = vadd.f32 %v588, 1.0
        %v593 = vadd.f32 %v589, 1.0
        %v594 = vadd.f32 %v590, 1.0
        %v595 = vadd.f32 %v591, 1.0
        %v596 = vmul.f32 %v580, %v592
        %v597 = vmul.f32 %v581, %v593
        %v598 = vmul.f32 %v582, %v594
        %v599 = vmul.f32 %v583, %v595
        %v600 = vld [vmem:[#allocation7] sm:$0xff]
        %v601 = vld [vmem:[#allocation7 + $0x8] sm:$0xff]
        %v602 = vld [vmem:[#allocation7 + $0x10] sm:$0xff]
        %v603 = vld [vmem:[#allocation7 + $0x18] sm:$0xff]
        %v604 = vld [vmem:[#allocation7 + $0x20] sm:$0xff]
        %v605 = vld [vmem:[#allocation7 + $0x28] sm:$0xff]
        %v606 = vld [vmem:[#allocation7 + $0x30] sm:$0xff]
        %v607 = vld [vmem:[#allocation7 + $0x38] sm:$0xff]
        %v608 = vld [vmem:[#allocation7 + $0x40] sm:$0xff]
        %v609 = vld [vmem:[#allocation7 + $0x48] sm:$0xff]
        %v610 = vld [vmem:[#allocation7 + $0x50] sm:$0xff]
        %v611 = vld [vmem:[#allocation7 + $0x58] sm:$0xff]
        %v612 = vld [vmem:[#allocation7 + $0x60] sm:$0xff]
        %v613 = vld [vmem:[#allocation7 + $0x68] sm:$0xff]
        %v614 = vld [vmem:[#allocation7 + $0x70] sm:$0xff]
        %v615 = vld [vmem:[#allocation7 + $0x78] sm:$0xff]
        %v616 = vld [vmem:[#allocation7 + $0x80] sm:$0xff]
        %v617 = vld [vmem:[#allocation7 + $0x88] sm:$0xff]
        %v618 = vld [vmem:[#allocation7 + $0x90] sm:$0xff]
        %v619 = vld [vmem:[#allocation7 + $0x98] sm:$0xff]
        %v620 = vld [vmem:[#allocation7 + $0xa0] sm:$0xff]
        %v621 = vld [vmem:[#allocation7 + $0xa8] sm:$0xff]
        %v622 = vld [vmem:[#allocation7 + $0xb0] sm:$0xff]
        %v623 = vld [vmem:[#allocation7 + $0xb8] sm:$0xff]
        %v624 = vld [vmem:[#allocation7 + $0xc0] sm:$0xff]
        %v625 = vld [vmem:[#allocation7 + $0xc8] sm:$0xff]
        %v626 = vld [vmem:[#allocation7 + $0xd0] sm:$0xff]
        %v627 = vld [vmem:[#allocation7 + $0xd8] sm:$0xff]
        %v628 = vld [vmem:[#allocation7 + $0xe0] sm:$0xff]
        %v629 = vld [vmem:[#allocation7 + $0xe8] sm:$0xff]
        %v630 = vld [vmem:[#allocation7 + $0xf0] sm:$0xff]
        %v631 = vld [vmem:[#allocation7 + $0xf8] sm:$0xff]
        %v632 = vld [vmem:[#allocation7 + $0x100] sm:$0xff]
        %v633 = vld [vmem:[#allocation7 + $0x108] sm:$0xff]
        %v634 = vld [vmem:[#allocation7 + $0x110] sm:$0xff]
        %v635 = vld [vmem:[#allocation7 + $0x118] sm:$0xff]
        %v636 = vld [vmem:[#allocation7 + $0x120] sm:$0xff]
        %v637 = vld [vmem:[#allocation7 + $0x128] sm:$0xff]
        %v638 = vld [vmem:[#allocation7 + $0x130] sm:$0xff]
        %v639 = vld [vmem:[#allocation7 + $0x138] sm:$0xff]
        %v640 = vld [vmem:[#allocation7 + $0x140] sm:$0xff]
        %v641 = vld [vmem:[#allocation7 + $0x148] sm:$0xff]
        %v642 = vld [vmem:[#allocation7 + $0x150] sm:$0xff]
        %v643 = vld [vmem:[#allocation7 + $0x158] sm:$0xff]
        %v644 = vld [vmem:[#allocation7 + $0x160] sm:$0xff]
        %v645 = vld [vmem:[#allocation7 + $0x168] sm:$0xff]
        %v646 = vld [vmem:[#allocation7 + $0x170] sm:$0xff]
        %v647 = vld [vmem:[#allocation7 + $0x178] sm:$0xff]
        %v648 = vld [vmem:[#allocation7 + $0x180] sm:$0xff]
        %v649 = vld [vmem:[#allocation7 + $0x188] sm:$0xff]
        %v650 = vld [vmem:[#allocation7 + $0x190] sm:$0xff]
        %v651 = vld [vmem:[#allocation7 + $0x198] sm:$0xff]
        %v652 = vld [vmem:[#allocation7 + $0x1a0] sm:$0xff]
        %v653 = vld [vmem:[#allocation7 + $0x1a8] sm:$0xff]
        %v654 = vld [vmem:[#allocation7 + $0x1b0] sm:$0xff]
        %v655 = vld [vmem:[#allocation7 + $0x1b8] sm:$0xff]
        %v656 = vld [vmem:[#allocation7 + $0x1c0] sm:$0xff]
        %v657 = vld [vmem:[#allocation7 + $0x1c8] sm:$0xff]
        %v658 = vld [vmem:[#allocation7 + $0x1d0] sm:$0xff]
        %v659 = vld [vmem:[#allocation7 + $0x1d8] sm:$0xff]
        %v660 = vld [vmem:[#allocation7 + $0x1e0] sm:$0xff]
        %v661 = vld [vmem:[#allocation7 + $0x1e8] sm:$0xff]
        %v662 = vld [vmem:[#allocation7 + $0x1f0] sm:$0xff]
        %v663 = vld [vmem:[#allocation7 + $0x1f8] sm:$0xff]
        %v664 = vld [vmem:[%s6] sm:$0x1]
        %v666 = vlaneseq
        %v667 = vshrl.u32 %v666, 7
        %v668 = vsub.s32 0, %v667
        %v669 = vrot.slane %v664, %v668
        %671 = vmatprep.subr.mxu0 0.0
        %672 = vmatpush1.msra.mxu0 %v600
        %673 = vmatprep.subr.mxu0 0.0
        %674 = vmatpush1.msra.mxu0 %v601
        %675 = vmatprep.subr.mxu0 0.0
        %676 = vmatpush1.msra.mxu0 %v602
        %677 = vmatprep.subr.mxu0 0.0
        %678 = vmatpush1.msra.mxu0 %v603
        %679 = vmatprep.subr.mxu0 0.0
        %680 = vmatpush1.msra.mxu0 %v604
        %681 = vmatprep.subr.mxu0 0.0
        %682 = vmatpush1.msra.mxu0 %v605
        %683 = vmatprep.subr.mxu0 0.0
        %684 = vmatpush1.msra.mxu0 %v606
        %685 = vmatprep.subr.mxu0 0.0
        %686 = vmatpush1.msra.mxu0 %v607
        %687 = vmatprep.subr.mxu0 0.0
        %688 = vmatpush1.msra.mxu0 %v608
        %689 = vmatprep.subr.mxu0 0.0
        %690 = vmatpush1.msra.mxu0 %v609
        %691 = vmatprep.subr.mxu0 0.0
        %692 = vmatpush1.msra.mxu0 %v610
        %693 = vmatprep.subr.mxu0 0.0
        %694 = vmatpush1.msra.mxu0 %v611
        %695 = vmatprep.subr.mxu0 0.0
        %696 = vmatpush1.msra.mxu0 %v612
        %697 = vmatprep.subr.mxu0 0.0
        %698 = vmatpush1.msra.mxu0 %v613
        %699 = vmatprep.subr.mxu0 0.0
        %700 = vmatpush1.msra.mxu0 %v614
        %701 = vmatprep.subr.mxu0 0.0
        %702 = vmatpush1.msra.mxu0 %v615
        %703 = vmatprep.subr.mxu0 0.0
        %704 = vmatpush1.msra.mxu0 %v616
        %705 = vmatprep.subr.mxu0 0.0
        %706 = vmatpush1.msra.mxu0 %v617
        %707 = vmatprep.subr.mxu0 0.0
        %708 = vmatpush1.msra.mxu0 %v618
        %709 = vmatprep.subr.mxu0 0.0
        %710 = vmatpush1.msra.mxu0 %v619
        %711 = vmatprep.subr.mxu0 0.0
        %712 = vmatpush1.msra.mxu0 %v620
        %713 = vmatprep.subr.mxu0 0.0
        %714 = vmatpush1.msra.mxu0 %v621
        %715 = vmatprep.subr.mxu0 0.0
        %716 = vmatpush1.msra.mxu0 %v622
        %717 = vmatprep.subr.mxu0 0.0
        %718 = vmatpush1.msra.mxu0 %v623
        %719 = vmatprep.subr.mxu0 0.0
        %720 = vmatpush1.msra.mxu0 %v624
        %721 = vmatprep.subr.mxu0 0.0
        %722 = vmatpush1.msra.mxu0 %v625
        %723 = vmatprep.subr.mxu0 0.0
        %724 = vmatpush1.msra.mxu0 %v626
        %725 = vmatprep.subr.mxu0 0.0
        %726 = vmatpush1.msra.mxu0 %v627
        %727 = vmatprep.subr.mxu0 0.0
        %728 = vmatpush1.msra.mxu0 %v628
        %729 = vmatprep.subr.mxu0 0.0
        %730 = vmatpush1.msra.mxu0 %v629
        %731 = vmatprep.subr.mxu0 0.0
        %732 = vmatpush1.msra.mxu0 %v630
        %733 = vmatprep.subr.mxu0 0.0
        %734 = vmatpush1.msra.mxu0 %v631
        %735 = vmatprep.mubr.f32.mxu0 %v597
        %736 = vmatmul.mubr.f32.gmra.mrb[0].mxu0 %v596
        %v737 = vpop.f32.mrb[0].mxu0
        %v738 = vadd.f32 %v669, %v737
        %v739 = vpop.f32.mrb[0].mxu0
        %740 = vdwg.mxu0
        %741 = vmatprep.subr.mxu0 0.0
        %742 = vmatpush1.msra.mxu0 %v632
        %743 = vmatprep.subr.mxu0 0.0
        %744 = vmatpush1.msra.mxu0 %v633
        %745 = vmatprep.subr.mxu0 0.0
        %746 = vmatpush1.msra.mxu0 %v634
        %747 = vmatprep.subr.mxu0 0.0
        %748 = vmatpush1.msra.mxu0 %v635
        %749 = vmatprep.subr.mxu0 0.0
        %750 = vmatpush1.msra.mxu0 %v636
        %751 = vmatprep.subr.mxu0 0.0
        %752 = vmatpush1.msra.mxu0 %v637
        %753 = vmatprep.subr.mxu0 0.0
        %754 = vmatpush1.msra.mxu0 %v638
        %755 = vmatprep.subr.mxu0 0.0
        %756 = vmatpush1.msra.mxu0 %v639
        %757 = vmatprep.subr.mxu0 0.0
        %758 = vmatpush1.msra.mxu0 %v640
        %759 = vmatprep.subr.mxu0 0.0
        %760 = vmatpush1.msra.mxu0 %v641
        %761 = vmatprep.subr.mxu0 0.0
        %762 = vmatpush1.msra.mxu0 %v642
        %763 = vmatprep.subr.mxu0 0.0
        %764 = vmatpush1.msra.mxu0 %v643
        %765 = vmatprep.subr.mxu0 0.0
        %766 = vmatpush1.msra.mxu0 %v644
        %767 = vmatprep.subr.mxu0 0.0
        %768 = vmatpush1.msra.mxu0 %v645
        %769 = vmatprep.subr.mxu0 0.0
        %770 = vmatpush1.msra.mxu0 %v646
        %771 = vmatprep.subr.mxu0 0.0
        %772 = vmatpush1.msra.mxu0 %v647
        %773 = vmatprep.subr.mxu0 0.0
        %774 = vmatpush1.msra.mxu0 %v648
        %775 = vmatprep.subr.mxu0 0.0
        %776 = vmatpush1.msra.mxu0 %v649
        %777 = vmatprep.subr.mxu0 0.0
        %778 = vmatpush1.msra.mxu0 %v650
        %779 = vmatprep.subr.mxu0 0.0
        %780 = vmatpush1.msra.mxu0 %v651
        %781 = vmatprep.subr.mxu0 0.0
        %782 = vmatpush1.msra.mxu0 %v652
        %783 = vmatprep.subr.mxu0 0.0
        %784 = vmatpush1.msra.mxu0 %v653
        %785 = vmatprep.subr.mxu0 0.0
        %786 = vmatpush1.msra.mxu0 %v654
        %787 = vmatprep.subr.mxu0 0.0
        %788 = vmatpush1.msra.mxu0 %v655
        %789 = vmatprep.subr.mxu0 0.0
        %790 = vmatpush1.msra.mxu0 %v656
        %791 = vmatprep.subr.mxu0 0.0
        %792 = vmatpush1.msra.mxu0 %v657
        %793 = vmatprep.subr.mxu0 0.0
        %794 = vmatpush1.msra.mxu0 %v658
        %795 = vmatprep.subr.mxu0 0.0
        %796 = vmatpush1.msra.mxu0 %v659
        %797 = vmatprep.subr.mxu0 0.0
        %798 = vmatpush1.msra.mxu0 %v660
        %799 = vmatprep.subr.mxu0 0.0
        %800 = vmatpush1.msra.mxu0 %v661
        %801 = vmatprep.subr.mxu0 0.0
        %802 = vmatpush1.msra.mxu0 %v662
        %803 = vmatprep.subr.mxu0 0.0
        %804 = vmatpush1.msra.mxu0 %v663
        %805 = vmatprep.mubr.f32.mxu0 %v599
        %806 = vmatmul.mubr.f32.gmra.mrb[0].mxu0 %v598
        %v807 = vpop.f32.mrb[0].mxu0
        %v808 = vadd.f32 %v738, %v807
        %v809 = vpop.f32.mrb[0].mxu0
        %810 = vdwg.mxu0
        %811 = vst [vmem:[%s322] sm:$0xff] %v808
        %s812 = sand.u32 %s185, 1
        %s813 = scalar_lea.sflag [#allocation4], %s812
        %s814 = sand.u32 %s185, 1
        %s815 = smul.addr %s814, 8
        %s816 = scalar_lea.vmem [#allocation8], %s815
        // Predicated region
        $region61: #{tpu_custom_call.1} parent=47 // pred_check
          %p817 = pneg %p195
        $region62: #{tpu_custom_call.1} parent=47 // pred_check_branch
          %819 = sbr.rel (%p817) target = $region64
        $region63: #{tpu_custom_call.1} parent=47 // pred_region
          %s821 = ssub.s32 128, 128
          %822 = vsyncadd %s813, %s821
          %s823 = smul.addr %s25, 128
          %s824 = scalar_lea.hbm %s7, %s823
          %s826 = sshll.u32 %s816, 4
          %s827 = int_to_ptr.vmem [resolvable:$true] %s826
          %829 = dma.vmem_to_hbm [thread:$0]  %s827, 128, %s824, %s813
        $region64: #{tpu_custom_call.1} parent=47 // pred_fallthru
          _
      $region48: #{tpu_custom_call.1} parent=5 // pred_fallthru
        _
      %p830 = scmp.le.s32.totalorder 2, %s20
      // Predicated region
      $region65: #{tpu_custom_call.1} parent=5 // pred_check
        %p831 = pneg %p830
      $region66: #{tpu_custom_call.1} parent=5 // pred_check_branch
        %833 = sbr.rel (%p831) target = $region68
      $region67: #{tpu_custom_call.1} parent=5 // pred_region
        %s834 = ssub.s32 %s20, 2
        // Predicated region
        $region69: #{tpu_custom_call.1} parent=67 // pred_check
          %p835 = pneg %p201
        $region70: #{tpu_custom_call.1} parent=67 // pred_check_branch
          %837 = sbr.rel (%p835) target = $region72
        $region71: #{tpu_custom_call.1} parent=67 // pred_region
          %s838 = sand.u32 %s186, 1
          %s839 = scalar_lea.sflag [#allocation4], %s838
          %s840 = sand.u32 %s186, 1
          %s841 = smul.addr %s840, 8
          %s842 = scalar_lea.vmem [#allocation8], %s841
          %843 = dma.done %s839, 128
        $region72: #{tpu_custom_call.1} parent=67 // pred_fallthru
          _
      $region68: #{tpu_custom_call.1} parent=5 // pred_fallthru
        _
    $region6: #{tpu_custom_call.1} parent=1 // loop_footer
      %s24 = sadd.s32 1, %s20
    $region7: #{tpu_custom_call.1} parent=1 // loop_footer_branch
      %19 = sbr.rel target = $region3
    $region8: #{tpu_custom_call.1} parent=1 // loop_exit
      _
    %844 = vsyncpa [#allocation3], 1
    %s845 = scalar_lea.sflag [#allocation3], 1
    %846 = vsyncpa %s845, 1
    %847 = vsyncpa [#allocation6], 1
    %848 = vsyncpa [#allocation4], 1
    %s849 = scalar_lea.sflag [#allocation4], 1
    %850 = vsyncpa %s849, 1

</llo_original>
